<compile_context>
chip_gen: v6e
topology: v6e:2x2x1
jax: 0.10.0
libtpu: 0.0.40
codegen_flags: <defaults>
</compile_context>

<pallas_src>
import functools

import jax
import jax.numpy as jnp
from jax.experimental import pallas as pl
from jax.experimental.pallas import tpu as pltpu

HIDDEN = 128


def _mlp_kernel(inp_ref, w1_ref, b1_ref, w2_ref, b2_ref, w3_ref, b3_ref, out_ref):
    # Batch-on-lane layout:
    #   inp_ref: (3, TM)       w1: (128, 3)    b1: (128, 1)
    #   w2:      (128, 128)    b2: (128, 1)
    #   w3:      (1, 128)      b3: (1, 1) in SMEM
    #   out_ref: (1, TM)
    inp = inp_ref[...]
    w1 = w1_ref[...]

    # Layer 1 (K=3): three broadcast FMAs on the VPU (avoids a padded K=3 MXU op).
    h1 = (w1[:, 0:1] * inp[0:1, :]
          + w1[:, 1:2] * inp[1:2, :]
          + w1[:, 2:3] * inp[2:3, :]
          + b1_ref[...])
    h1 = jnp.maximum(h1, 0.0)

    # Layer 2 (128x128): MXU matmul, f32 accumulation.
    h2 = jnp.dot(w2_ref[...], h1, preferred_element_type=jnp.float32) + b2_ref[...]
    h2 = jnp.maximum(h2, 0.0)

    # Layer 3 (1x128): MXU matmul; scalar bias read from SMEM in the epilogue.
    u = jnp.dot(w3_ref[...], h2, preferred_element_type=jnp.float32) + b3_ref[0, 0]
    out_ref[...] = u.astype(out_ref.dtype)   # (1, TM): lane-dense store


@functools.partial(jax.jit, static_argnames=("tm",))
def heat_equation_nn(x, y, t, params, *, tm=512):
    """Forward pass of HeatEquationNN.

    x, y, t: (N, 1) float32 arrays. Returns u: (N, 1) float32.
    """
    w1, b1, w2, b2, w3, b3 = params
    n = x.shape[0]

    # Feature-major input (3, N): batch on the lane axis. (N,1)->(1,N) reshapes
    # are free; no batch padding needed (Pallas masks the ragged tail block).
    inp = jnp.concatenate(
        [x.reshape(1, -1), y.reshape(1, -1), t.reshape(1, -1)], axis=0)

    grid = (pl.cdiv(n, tm),)
    flops = 2 * n * HIDDEN * (3 + HIDDEN + 1)
    bytes_accessed = (4 * (3 * n + n)  # input (3,N) + output (1,N)
                      + 4 * (w1.size + b1.size + w2.size + b2.size
                             + w3.size + b3.size))

    out = pl.pallas_call(
        _mlp_kernel,
        out_shape=jax.ShapeDtypeStruct((1, n), jnp.float32),
        grid_spec=pltpu.PrefetchScalarGridSpec(
            num_scalar_prefetch=0,
            grid=grid,
            in_specs=[
                pl.BlockSpec((3, tm), lambda i: (0, i)),              # input tile
                pl.BlockSpec((HIDDEN, 3), lambda i: (0, 0)),          # w1 (full)
                pl.BlockSpec((HIDDEN, 1), lambda i: (0, 0)),          # b1
                pl.BlockSpec((HIDDEN, HIDDEN), lambda i: (0, 0)),     # w2
                pl.BlockSpec((HIDDEN, 1), lambda i: (0, 0)),          # b2
                pl.BlockSpec((1, HIDDEN), lambda i: (0, 0)),          # w3
                pl.BlockSpec(memory_space=pltpu.MemorySpace.SMEM),    # b3 scalar
            ],
            out_specs=pl.BlockSpec((1, tm), lambda i: (0, i)),        # lane-dense
        ),
        compiler_params=pltpu.CompilerParams(
            dimension_semantics=("parallel",),
        ),
        cost_estimate=pl.CostEstimate(
            flops=flops, transcendentals=0, bytes_accessed=bytes_accessed),
    )(inp, w1, b1, w2, b2, w3, b3)

    return out.reshape(n, 1)


def init_params(key):
    """Deterministic init matching nn.Linear (uniform +-1/sqrt(fan_in)), PyTorch layout."""
    k1, k2, k3, k4, k5, k6 = jax.random.split(key, 6)

    def u(k, shape, fan_in):
        bound = 1.0 / jnp.sqrt(fan_in)
        return jax.random.uniform(k, shape, jnp.float32, -bound, bound)

    w1 = u(k1, (HIDDEN, 3), 3.0)          # fc1.weight (out, in)
    b1 = u(k2, (HIDDEN, 1), 3.0)          # fc1.bias   (column for lane-broadcast)
    w2 = u(k3, (HIDDEN, HIDDEN), 128.0)   # fc2.weight
    b2 = u(k4, (HIDDEN, 1), 128.0)        # fc2.bias
    w3 = u(k5, (1, HIDDEN), 128.0)        # fc3.weight
    b3 = u(k6, (1, 1), 128.0)             # fc3.bias
    return (w1, b1, w2, b2, w3, b3)


def _reference(x, y, t, params):
    w1, b1, w2, b2, w3, b3 = params
    inp = jnp.concatenate([x, y, t], axis=1)                 # (N, 3)
    h = jnp.maximum(inp @ w1.T + b1.reshape(1, -1), 0.0)
    h = jnp.maximum(h @ w2.T + b2.reshape(1, -1), 0.0)
    return h @ w3.T + b3.reshape(1, 1)


if __name__ == "__main__":
    key = jax.random.PRNGKey(0)
    kp, kx, ky, kt = jax.random.split(key, 4)
    params = init_params(kp)

    N = 200  # deliberately not a multiple of the batch tile (exercises ragged tail)
    x = jax.random.normal(kx, (N, 1), jnp.float32)
    y = jax.random.normal(ky, (N, 1), jnp.float32)
    t = jax.random.normal(kt, (N, 1), jnp.float32)

    u = heat_equation_nn(x, y, t, params)
    u = jax.block_until_ready(u)

    u_ref = _reference(x, y, t, params)
    assert u.shape == (N, 1)
    assert jnp.allclose(u, u_ref, atol=1e-5, rtol=1e-5)
    print("KERNEL_OK")
</pallas_src>

<mosaic_0001>
module attributes {stable_mosaic.version = 11 : i64} {
  func.func @_mlp_kernel(%arg0: i32, %arg1: memref<3x512xf32, #tpu.memory_space<vmem>>, %arg2: memref<128x3xf32, #tpu.memory_space<vmem>>, %arg3: memref<128x1xf32, #tpu.memory_space<vmem>>, %arg4: memref<128x128xf32, #tpu.memory_space<vmem>>, %arg5: memref<128x1xf32, #tpu.memory_space<vmem>>, %arg6: memref<1x128xf32, #tpu.memory_space<vmem>>, %arg7: memref<1x1xf32, #tpu.memory_space<smem>>, %arg8: memref<1x512xf32, #tpu.memory_space<vmem>>) attributes {dimension_semantics = [#tpu.dimension_semantics<parallel>], iteration_bounds = array<i64: 1>, scalar_prefetch = 0 : i64, scratch_operands = 0 : i64, tpu.core_type = #tpu.core_type<tc>, window_params = [{transform_indices = @transform_0, window_bounds = array<i64: 3, 512>}, {pipeline_mode = #tpu.pipeline_mode<synchronous>, transform_indices = @transform_1, window_bounds = array<i64: 128, 3>}, {pipeline_mode = #tpu.pipeline_mode<synchronous>, transform_indices = @transform_2, window_bounds = array<i64: 128, 1>}, {pipeline_mode = #tpu.pipeline_mode<synchronous>, transform_indices = @transform_3, window_bounds = array<i64: 128, 128>}, {pipeline_mode = #tpu.pipeline_mode<synchronous>, transform_indices = @transform_4, window_bounds = array<i64: 128, 1>}, {pipeline_mode = #tpu.pipeline_mode<synchronous>, transform_indices = @transform_5, window_bounds = array<i64: 1, 128>}, {transform_indices = @transform_6, window_bounds = array<i64: 1, 1>}, {transform_indices = @transform_7, window_bounds = array<i64: 1, 512>}]} {
    %c0 = arith.constant 0 : index
    %c0_0 = arith.constant 0 : index
    %0 = vector.load %arg1[%c0, %c0_0] : memref<3x512xf32, #tpu.memory_space<vmem>>, vector<3x512xf32>
    %c0_1 = arith.constant 0 : index
    %c0_2 = arith.constant 0 : index
    %1 = vector.load %arg2[%c0_1, %c0_2] : memref<128x3xf32, #tpu.memory_space<vmem>>, vector<128x3xf32>
    %2 = vector.extract_strided_slice %1 {offsets = [0, 0], sizes = [128, 1], strides = [1, 1]} : vector<128x3xf32> to vector<128x1xf32>
    %3 = vector.extract_strided_slice %0 {offsets = [0, 0], sizes = [1, 512], strides = [1, 1]} : vector<3x512xf32> to vector<1x512xf32>
    %4 = vector.broadcast %2 : vector<128x1xf32> to vector<128x512xf32>
    %5 = vector.broadcast %3 : vector<1x512xf32> to vector<128x512xf32>
    %6 = arith.mulf %4, %5 : vector<128x512xf32>
    %7 = vector.extract_strided_slice %1 {offsets = [0, 1], sizes = [128, 1], strides = [1, 1]} : vector<128x3xf32> to vector<128x1xf32>
    %8 = vector.extract_strided_slice %0 {offsets = [1, 0], sizes = [1, 512], strides = [1, 1]} : vector<3x512xf32> to vector<1x512xf32>
    %9 = vector.broadcast %7 : vector<128x1xf32> to vector<128x512xf32>
    %10 = vector.broadcast %8 : vector<1x512xf32> to vector<128x512xf32>
    %11 = arith.mulf %9, %10 : vector<128x512xf32>
    %12 = arith.addf %6, %11 : vector<128x512xf32>
    %13 = vector.extract_strided_slice %1 {offsets = [0, 2], sizes = [128, 1], strides = [1, 1]} : vector<128x3xf32> to vector<128x1xf32>
    %14 = vector.extract_strided_slice %0 {offsets = [2, 0], sizes = [1, 512], strides = [1, 1]} : vector<3x512xf32> to vector<1x512xf32>
    %15 = vector.broadcast %13 : vector<128x1xf32> to vector<128x512xf32>
    %16 = vector.broadcast %14 : vector<1x512xf32> to vector<128x512xf32>
    %17 = arith.mulf %15, %16 : vector<128x512xf32>
    %18 = arith.addf %12, %17 : vector<128x512xf32>
    %c0_3 = arith.constant 0 : index
    %c0_4 = arith.constant 0 : index
    %19 = vector.load %arg3[%c0_3, %c0_4] : memref<128x1xf32, #tpu.memory_space<vmem>>, vector<128x1xf32>
    %20 = vector.broadcast %19 : vector<128x1xf32> to vector<128x512xf32>
    %21 = arith.addf %18, %20 : vector<128x512xf32>
    %cst = arith.constant 0.000000e+00 : f32
    %22 = vector.broadcast %cst : f32 to vector<128x512xf32>
    %23 = arith.maximumf %21, %22 : vector<128x512xf32>
    %c0_5 = arith.constant 0 : index
    %c0_6 = arith.constant 0 : index
    %24 = vector.load %arg4[%c0_5, %c0_6] : memref<128x128xf32, #tpu.memory_space<vmem>>, vector<128x128xf32>
    %cst_7 = arith.constant dense<0.000000e+00> : vector<128x512xf32>
    %25 = tpu.matmul %24, %23, %cst_7 {dimension_numbers = #tpu.dot_dimension_numbers<[1], [0], [0], [1], [0, 0, 1, 1], [], []>} : vector<128x128xf32>, vector<128x512xf32>, vector<128x512xf32> -> vector<128x512xf32>
    %c0_8 = arith.constant 0 : index
    %c0_9 = arith.constant 0 : index
    %26 = vector.load %arg5[%c0_8, %c0_9] : memref<128x1xf32, #tpu.memory_space<vmem>>, vector<128x1xf32>
    %27 = vector.broadcast %26 : vector<128x1xf32> to vector<128x512xf32>
    %28 = arith.addf %25, %27 : vector<128x512xf32>
    %cst_10 = arith.constant 0.000000e+00 : f32
    %29 = vector.broadcast %cst_10 : f32 to vector<128x512xf32>
    %30 = arith.maximumf %28, %29 : vector<128x512xf32>
    %c0_11 = arith.constant 0 : index
    %c0_12 = arith.constant 0 : index
    %31 = vector.load %arg6[%c0_11, %c0_12] : memref<1x128xf32, #tpu.memory_space<vmem>>, vector<1x128xf32>
    %cst_13 = arith.constant dense<0.000000e+00> : vector<1x512xf32>
    %32 = tpu.matmul %31, %30, %cst_13 {dimension_numbers = #tpu.dot_dimension_numbers<[1], [0], [0], [1], [0, 0, 1, 1], [], []>} : vector<1x128xf32>, vector<128x512xf32>, vector<1x512xf32> -> vector<1x512xf32>
    %c0_14 = arith.constant 0 : index
    %c0_15 = arith.constant 0 : index
    %33 = memref.load %arg7[%c0_14, %c0_15] : memref<1x1xf32, #tpu.memory_space<smem>>
    %34 = vector.broadcast %33 : f32 to vector<1x512xf32>
    %35 = arith.addf %32, %34 : vector<1x512xf32>
    %c0_16 = arith.constant 0 : index
    %c0_17 = arith.constant 0 : index
    %36 = vector.load %arg8[%c0_16, %c0_17] : memref<1x512xf32, #tpu.memory_space<vmem>>, vector<1x512xf32>
    tpu.vector_store %arg8[%c0_16, %c0_17], %35 {strides = array<i32>} : memref<1x512xf32, #tpu.memory_space<vmem>>, vector<1x512xf32>,
    return
  }
  func.func @transform_0(%arg0: i32) -> (i32, i32) {
    %c0_i32 = arith.constant 0 : i32
    %c0_i32_0 = arith.constant 0 : i32
    return %c0_i32, %arg0 : i32, i32
  }
  func.func @transform_1(%arg0: i32) -> (i32, i32) {
    %c0_i32 = arith.constant 0 : i32
    %c0_i32_0 = arith.constant 0 : i32
    %c0_i32_1 = arith.constant 0 : i32
    return %c0_i32, %c0_i32_0 : i32, i32
  }
  func.func @transform_2(%arg0: i32) -> (i32, i32) {
    %c0_i32 = arith.constant 0 : i32
    %c0_i32_0 = arith.constant 0 : i32
    %c0_i32_1 = arith.constant 0 : i32
    return %c0_i32, %c0_i32_0 : i32, i32
  }
  func.func @transform_3(%arg0: i32) -> (i32, i32) {
    %c0_i32 = arith.constant 0 : i32
    %c0_i32_0 = arith.constant 0 : i32
    %c0_i32_1 = arith.constant 0 : i32
    return %c0_i32, %c0_i32_0 : i32, i32
  }
  func.func @transform_4(%arg0: i32) -> (i32, i32) {
    %c0_i32 = arith.constant 0 : i32
    %c0_i32_0 = arith.constant 0 : i32
    %c0_i32_1 = arith.constant 0 : i32
    return %c0_i32, %c0_i32_0 : i32, i32
  }
  func.func @transform_5(%arg0: i32) -> (i32, i32) {
    %c0_i32 = arith.constant 0 : i32
    %c0_i32_0 = arith.constant 0 : i32
    %c0_i32_1 = arith.constant 0 : i32
    return %c0_i32, %c0_i32_0 : i32, i32
  }
  func.func @transform_6(%arg0: i32) -> (i32, i32) {
    %c0_i32 = arith.constant 0 : i32
    %c0_i32_0 = arith.constant 0 : i32
    %c0_i32_1 = arith.constant 0 : i32
    return %c0_i32, %c0_i32_0 : i32, i32
  }
  func.func @transform_7(%arg0: i32) -> (i32, i32) {
    %c0_i32 = arith.constant 0 : i32
    %c0_i32_0 = arith.constant 0 : i32
    return %c0_i32, %arg0 : i32, i32
  }
}

</mosaic_0001>

<llo_original>
// kernel: heat_equation_nn.1
$region0: #{heat_equation_nn.1}
  #allocation0 [shape = 'u32[]', space=smem, size = 0x4, offset = 0x4, fixed_abs, tag = 'smem constant byte address 0x4 - core index']
  #allocation1 [shape = 'u32[144,128]{1,0:T(1,128)}', space=vmem, size = 0x12000, scoped, tag = 'internal scratch']
  #allocation2 [shape = 'f32[1,1]{1,0:T(1,128)S(6)}', space=smem, size = 0x200, scoped, tag = 'scoped memory for heat_equation_nn.1']
  %s0 = inlined_call_operand.vmem [shape: f32[3,200], index: 0, kind: input, shape index: {}]
  %s1 = inlined_call_operand.vmem [shape: f32[128,3], index: 1, kind: input, shape index: {}]
  %s2 = inlined_call_operand.vmem [shape: f32[128,1], index: 2, kind: input, shape index: {}]
  %s3 = inlined_call_operand.vmem [shape: f32[128,128], index: 3, kind: input, shape index: {}]
  %s4 = inlined_call_operand.vmem [shape: f32[128,1], index: 4, kind: input, shape index: {}]
  %s5 = inlined_call_operand.vmem [shape: f32[1,128], index: 5, kind: input, shape index: {}]
  %s6 = inlined_call_operand.<no memory space> [shape: f32[1,1], index: 6, kind: input, shape index: {}]
  %s7 = inlined_call_operand.hbm [shape: f32[1,200], index: 7, kind: output, shape index: {}]
  %s8 = sld [smem:[#allocation0]]
  $region38: #{heat_equation_nn.1} parent=0
    _
  %s10 = ssub.s32 1, %s8
  %s11 = scalar_select 0, %s10, %s8
  %12 = sst [smem:[#allocation2]] %s6
  $region1: #{heat_equation_nn.1} parent=0
    #allocation3 [shape = 'u8[2048]{0}', space=vmem, size = 0x800, scoped, tag = 'output window, operand 0, single buffered']
    #allocation4 [shape = 's32[1]{0}', space=sflag, size = 0x4, scoped, tag = 'scoped memory for heat_equation_nn.1']
    %13 = vsyncpa [#allocation4], 0
    // Predicated region
    $region2: #{heat_equation_nn.1} parent=1 // pred_check
      _
    $region3: #{heat_equation_nn.1} parent=1 // pred_check_branch
      %15 = sbr.rel (0) target = $region5
    $region4: #{heat_equation_nn.1} parent=1 // pred_region
      _
    $region5: #{heat_equation_nn.1} parent=1 // pred_fallthru
      _
    // Predicated region
    $region6: #{heat_equation_nn.1} parent=1 // pred_check
      _
    $region7: #{heat_equation_nn.1} parent=1 // pred_check_branch
      %17 = sbr.rel (0) target = $region9
    $region8: #{heat_equation_nn.1} parent=1 // pred_region
      _
    $region9: #{heat_equation_nn.1} parent=1 // pred_fallthru
      _
    // Predicated region
    $region10: #{heat_equation_nn.1} parent=1 // pred_check
      _
    $region11: #{heat_equation_nn.1} parent=1 // pred_check_branch
      %19 = sbr.rel (0) target = $region13
    $region12: #{heat_equation_nn.1} parent=1 // pred_region
      _
    $region13: #{heat_equation_nn.1} parent=1 // pred_fallthru
      _
    // Predicated region
    $region14: #{heat_equation_nn.1} parent=1 // pred_check
      _
    $region15: #{heat_equation_nn.1} parent=1 // pred_check_branch
      %21 = sbr.rel (0) target = $region17
    $region16: #{heat_equation_nn.1} parent=1 // pred_region
      _
    $region17: #{heat_equation_nn.1} parent=1 // pred_fallthru
      _
    // Predicated region
    $region18: #{heat_equation_nn.1} parent=1 // pred_check
      _
    $region19: #{heat_equation_nn.1} parent=1 // pred_check_branch
      %23 = sbr.rel (0) target = $region21
    $region20: #{heat_equation_nn.1} parent=1 // pred_region
      _
    $region21: #{heat_equation_nn.1} parent=1 // pred_fallthru
      _
    // Predicated region
    $region22: #{heat_equation_nn.1} parent=1 // pred_check
      _
    $region23: #{heat_equation_nn.1} parent=1 // pred_check_branch
      %25 = sbr.rel (0) target = $region25
    $region24: #{heat_equation_nn.1} parent=1 // pred_region
      _
    $region25: #{heat_equation_nn.1} parent=1 // pred_fallthru
      _
    // Predicated region
    $region26: #{heat_equation_nn.1} parent=1 // pred_check
      _
    $region27: #{heat_equation_nn.1} parent=1 // pred_check_branch
      %27 = sbr.rel (0) target = $region29
    $region28: #{heat_equation_nn.1} parent=1 // pred_region
      _
    $region29: #{heat_equation_nn.1} parent=1 // pred_fallthru
      _
    %v28 = vld [vmem:[%s0] sm:$0x77]
    %v29 = vld [vmem:[%s0 + $0x8] sm:$0x77]
    %v30 = vld [vmem:[%s1] sm:$0xff]
    %v31 = vld [vmem:[%s1 + $0x8] sm:$0xff]
    %v32 = vld [vmem:[%s1 + $0x10] sm:$0xff]
    %v33 = vld [vmem:[%s1 + $0x18] sm:$0xff]
    %v34 = vld [vmem:[%s1 + $0x20] sm:$0xff]
    %v35 = vld [vmem:[%s1 + $0x28] sm:$0xff]
    %v36 = vld [vmem:[%s1 + $0x30] sm:$0xff]
    %v37 = vld [vmem:[%s1 + $0x38] sm:$0xff]
    %v38 = vld [vmem:[%s1 + $0x40] sm:$0xff]
    %v39 = vld [vmem:[%s1 + $0x48] sm:$0xff]
    %v40 = vld [vmem:[%s1 + $0x50] sm:$0xff]
    %v41 = vld [vmem:[%s1 + $0x58] sm:$0xff]
    %v42 = vld [vmem:[%s1 + $0x60] sm:$0xff]
    %v43 = vld [vmem:[%s1 + $0x68] sm:$0xff]
    %v44 = vld [vmem:[%s1 + $0x70] sm:$0xff]
    %v45 = vld [vmem:[%s1 + $0x78] sm:$0xff]
    %47 = vset.pattern.permute.xlu0 0
    %48 = vperm.xlu0 %47, %v30
    %v49 = vpop.permute.xlu0 %48
    %52 = vset.pattern.permute.xlu0 0
    %53 = vperm.xlu0 %52, %v31
    %v54 = vpop.permute.xlu0 %53
    %57 = vset.pattern.permute.xlu0 0
    %58 = vperm.xlu0 %57, %v32
    %v59 = vpop.permute.xlu0 %58
    %62 = vset.pattern.permute.xlu0 0
    %63 = vperm.xlu0 %62, %v33
    %v64 = vpop.permute.xlu0 %63
    %67 = vset.pattern.permute.xlu0 0
    %68 = vperm.xlu0 %67, %v34
    %v69 = vpop.permute.xlu0 %68
    %72 = vset.pattern.permute.xlu0 0
    %73 = vperm.xlu0 %72, %v35
    %v74 = vpop.permute.xlu0 %73
    %77 = vset.pattern.permute.xlu0 0
    %78 = vperm.xlu0 %77, %v36
    %v79 = vpop.permute.xlu0 %78
    %82 = vset.pattern.permute.xlu0 0
    %83 = vperm.xlu0 %82, %v37
    %v84 = vpop.permute.xlu0 %83
    %87 = vset.pattern.permute.xlu0 0
    %88 = vperm.xlu0 %87, %v38
    %v89 = vpop.permute.xlu0 %88
    %92 = vset.pattern.permute.xlu0 0
    %93 = vperm.xlu0 %92, %v39
    %v94 = vpop.permute.xlu0 %93
    %97 = vset.pattern.permute.xlu0 0
    %98 = vperm.xlu0 %97, %v40
    %v99 = vpop.permute.xlu0 %98
    %102 = vset.pattern.permute.xlu0 0
    %103 = vperm.xlu0 %102, %v41
    %v104 = vpop.permute.xlu0 %103
    %107 = vset.pattern.permute.xlu0 0
    %108 = vperm.xlu0 %107, %v42
    %v109 = vpop.permute.xlu0 %108
    %112 = vset.pattern.permute.xlu0 0
    %113 = vperm.xlu0 %112, %v43
    %v114 = vpop.permute.xlu0 %113
    %117 = vset.pattern.permute.xlu0 0
    %118 = vperm.xlu0 %117, %v44
    %v119 = vpop.permute.xlu0 %118
    %122 = vset.pattern.permute.xlu0 0
    %123 = vperm.xlu0 %122, %v45
    %v124 = vpop.permute.xlu0 %123
    %v128 = vlaneseq
    %v129 = vshrl.u32 %v128, 7
    %v130 = vsub.s32 0, %v129
    %v131 = vrot.slane %v28, %v130
    %v132 = vlaneseq
    %v133 = vshrl.u32 %v132, 7
    %v134 = vsub.s32 4, %v133
    %v135 = vrot.slane %v28, %v134
    %v136 = vlaneseq
    %v137 = vshrl.u32 %v136, 7
    %v138 = vsub.s32 0, %v137
    %v139 = vrot.slane %v29, %v138
    %v140 = vlaneseq
    %v141 = vshrl.u32 %v140, 7
    %v142 = vsub.s32 4, %v141
    %v143 = vrot.slane %v29, %v142
    %v148 = vlaneseq
    %v149 = vshrl.u32 %v148, 7
    %v150 = vsub.s32 0, %v149
    %v151 = vrot.slane %v131, %v150
    %v152 = vlaneseq
    %v153 = vshrl.u32 %v152, 7
    %v154 = vsub.s32 0, %v153
    %v155 = vrot.slane %v135, %v154
    %v156 = vlaneseq
    %v157 = vshrl.u32 %v156, 7
    %v158 = vsub.s32 0, %v157
    %v159 = vrot.slane %v139, %v158
    %v160 = vlaneseq
    %v161 = vshrl.u32 %v160, 7
    %v162 = vsub.s32 0, %v161
    %v163 = vrot.slane %v143, %v162
    %v164 = vmul.f32 %v49, %v151
    %v165 = vmul.f32 %v49, %v155
    %v166 = vmul.f32 %v49, %v159
    %v167 = vmul.f32 %v49, %v163
    %v168 = vmul.f32 %v54, %v151
    %v169 = vmul.f32 %v54, %v155
    %v170 = vmul.f32 %v54, %v159
    %v171 = vmul.f32 %v54, %v163
    %v172 = vmul.f32 %v59, %v151
    %v173 = vmul.f32 %v59, %v155
    %v174 = vmul.f32 %v59, %v159
    %v175 = vmul.f32 %v59, %v163
    %v176 = vmul.f32 %v64, %v151
    %v177 = vmul.f32 %v64, %v155
    %v178 = vmul.f32 %v64, %v159
    %v179 = vmul.f32 %v64, %v163
    %v180 = vmul.f32 %v69, %v151
    %v181 = vmul.f32 %v69, %v155
    %v182 = vmul.f32 %v69, %v159
    %v183 = vmul.f32 %v69, %v163
    %v184 = vmul.f32 %v74, %v151
    %v185 = vmul.f32 %v74, %v155
    %v186 = vmul.f32 %v74, %v159
    %v187 = vmul.f32 %v74, %v163
    %v188 = vmul.f32 %v79, %v151
    %v189 = vmul.f32 %v79, %v155
    %v190 = vmul.f32 %v79, %v159
    %v191 = vmul.f32 %v79, %v163
    %v192 = vmul.f32 %v84, %v151
    %v193 = vmul.f32 %v84, %v155
    %v194 = vmul.f32 %v84, %v159
    %v195 = vmul.f32 %v84, %v163
    %v196 = vmul.f32 %v89, %v151
    %v197 = vmul.f32 %v89, %v155
    %v198 = vmul.f32 %v89, %v159
    %v199 = vmul.f32 %v89, %v163
    %v200 = vmul.f32 %v94, %v151
    %v201 = vmul.f32 %v94, %v155
    %v202 = vmul.f32 %v94, %v159
    %v203 = vmul.f32 %v94, %v163
    %v204 = vmul.f32 %v99, %v151
    %v205 = vmul.f32 %v99, %v155
    %v206 = vmul.f32 %v99, %v159
    %v207 = vmul.f32 %v99, %v163
    %v208 = vmul.f32 %v104, %v151
    %v209 = vmul.f32 %v104, %v155
    %v210 = vmul.f32 %v104, %v159
    %v211 = vmul.f32 %v104, %v163
    %v212 = vmul.f32 %v109, %v151
    %v213 = vmul.f32 %v109, %v155
    %v214 = vmul.f32 %v109, %v159
    %v215 = vmul.f32 %v109, %v163
    %v216 = vmul.f32 %v114, %v151
    %v217 = vmul.f32 %v114, %v155
    %v218 = vmul.f32 %v114, %v159
    %v219 = vmul.f32 %v114, %v163
    %v220 = vmul.f32 %v119, %v151
    %v221 = vmul.f32 %v119, %v155
    %v222 = vmul.f32 %v119, %v159
    %v223 = vmul.f32 %v119, %v163
    %v224 = vmul.f32 %v124, %v151
    %v225 = vmul.f32 %v124, %v155
    %v226 = vmul.f32 %v124, %v159
    %v227 = vmul.f32 %v124, %v163
    %228 = vset.pattern.permute.xlu0 1
    %229 = vperm.xlu0 %228, %v30
    %v230 = vpop.permute.xlu0 %229
    %232 = vset.pattern.permute.xlu0 1
    %233 = vperm.xlu0 %232, %v31
    %v234 = vpop.permute.xlu0 %233
    %236 = vset.pattern.permute.xlu0 1
    %237 = vperm.xlu0 %236, %v32
    %v238 = vpop.permute.xlu0 %237
    %240 = vset.pattern.permute.xlu0 1
    %241 = vperm.xlu0 %240, %v33
    %v242 = vpop.permute.xlu0 %241
    %244 = vset.pattern.permute.xlu0 1
    %245 = vperm.xlu0 %244, %v34
    %v246 = vpop.permute.xlu0 %245
    %248 = vset.pattern.permute.xlu0 1
    %249 = vperm.xlu0 %248, %v35
    %v250 = vpop.permute.xlu0 %249
    %252 = vset.pattern.permute.xlu0 1
    %253 = vperm.xlu0 %252, %v36
    %v254 = vpop.permute.xlu0 %253
    %256 = vset.pattern.permute.xlu0 1
    %257 = vperm.xlu0 %256, %v37
    %v258 = vpop.permute.xlu0 %257
    %260 = vset.pattern.permute.xlu0 1
    %261 = vperm.xlu0 %260, %v38
    %v262 = vpop.permute.xlu0 %261
    %264 = vset.pattern.permute.xlu0 1
    %265 = vperm.xlu0 %264, %v39
    %v266 = vpop.permute.xlu0 %265
    %268 = vset.pattern.permute.xlu0 1
    %269 = vperm.xlu0 %268, %v40
    %v270 = vpop.permute.xlu0 %269
    %272 = vset.pattern.permute.xlu0 1
    %273 = vperm.xlu0 %272, %v41
    %v274 = vpop.permute.xlu0 %273
    %276 = vset.pattern.permute.xlu0 1
    %277 = vperm.xlu0 %276, %v42
    %v278 = vpop.permute.xlu0 %277
    %280 = vset.pattern.permute.xlu0 1
    %281 = vperm.xlu0 %280, %v43
    %v282 = vpop.permute.xlu0 %281
    %284 = vset.pattern.permute.xlu0 1
    %285 = vperm.xlu0 %284, %v44
    %v286 = vpop.permute.xlu0 %285
    %288 = vset.pattern.permute.xlu0 1
    %289 = vperm.xlu0 %288, %v45
    %v290 = vpop.permute.xlu0 %289
    %v292 = vlaneseq
    %v293 = vshrl.u32 %v292, 7
    %v294 = vsub.s32 1, %v293
    %v295 = vrot.slane %v28, %v294
    %v296 = vlaneseq
    %v297 = vshrl.u32 %v296, 7
    %v298 = vsub.s32 5, %v297
    %v299 = vrot.slane %v28, %v298
    %v300 = vlaneseq
    %v301 = vshrl.u32 %v300, 7
    %v302 = vsub.s32 1, %v301
    %v303 = vrot.slane %v29, %v302
    %v304 = vlaneseq
    %v305 = vshrl.u32 %v304, 7
    %v306 = vsub.s32 5, %v305
    %v307 = vrot.slane %v29, %v306
    %v312 = vlaneseq
    %v313 = vshrl.u32 %v312, 7
    %v314 = vsub.s32 1, %v313
    %v315 = vrot.slane %v295, %v314
    %v316 = vlaneseq
    %v317 = vshrl.u32 %v316, 7
    %v318 = vsub.s32 1, %v317
    %v319 = vrot.slane %v299, %v318
    %v320 = vlaneseq
    %v321 = vshrl.u32 %v320, 7
    %v322 = vsub.s32 1, %v321
    %v323 = vrot.slane %v303, %v322
    %v324 = vlaneseq
    %v325 = vshrl.u32 %v324, 7
    %v326 = vsub.s32 1, %v325
    %v327 = vrot.slane %v307, %v326
    %v328 = vmul.f32 %v230, %v315
    %v329 = vmul.f32 %v230, %v319
    %v330 = vmul.f32 %v230, %v323
    %v331 = vmul.f32 %v230, %v327
    %v332 = vmul.f32 %v234, %v315
    %v333 = vmul.f32 %v234, %v319
    %v334 = vmul.f32 %v234, %v323
    %v335 = vmul.f32 %v234, %v327
    %v336 = vmul.f32 %v238, %v315
    %v337 = vmul.f32 %v238, %v319
    %v338 = vmul.f32 %v238, %v323
    %v339 = vmul.f32 %v238, %v327
    %v340 = vmul.f32 %v242, %v315
    %v341 = vmul.f32 %v242, %v319
    %v342 = vmul.f32 %v242, %v323
    %v343 = vmul.f32 %v242, %v327
    %v344 = vmul.f32 %v246, %v315
    %v345 = vmul.f32 %v246, %v319
    %v346 = vmul.f32 %v246, %v323
    %v347 = vmul.f32 %v246, %v327
    %v348 = vmul.f32 %v250, %v315
    %v349 = vmul.f32 %v250, %v319
    %v350 = vmul.f32 %v250, %v323
    %v351 = vmul.f32 %v250, %v327
    %v352 = vmul.f32 %v254, %v315
    %v353 = vmul.f32 %v254, %v319
    %v354 = vmul.f32 %v254, %v323
    %v355 = vmul.f32 %v254, %v327
    %v356 = vmul.f32 %v258, %v315
    %v357 = vmul.f32 %v258, %v319
    %v358 = vmul.f32 %v258, %v323
    %v359 = vmul.f32 %v258, %v327
    %v360 = vmul.f32 %v262, %v315
    %v361 = vmul.f32 %v262, %v319
    %v362 = vmul.f32 %v262, %v323
    %v363 = vmul.f32 %v262, %v327
    %v364 = vmul.f32 %v266, %v315
    %v365 = vmul.f32 %v266, %v319
    %v366 = vmul.f32 %v266, %v323
    %v367 = vmul.f32 %v266, %v327
    %v368 = vmul.f32 %v270, %v315
    %v369 = vmul.f32 %v270, %v319
    %v370 = vmul.f32 %v270, %v323
    %v371 = vmul.f32 %v270, %v327
    %v372 = vmul.f32 %v274, %v315
    %v373 = vmul.f32 %v274, %v319
    %v374 = vmul.f32 %v274, %v323
    %v375 = vmul.f32 %v274, %v327
    %v376 = vmul.f32 %v278, %v315
    %v377 = vmul.f32 %v278, %v319
    %v378 = vmul.f32 %v278, %v323
    %v379 = vmul.f32 %v278, %v327
    %v380 = vmul.f32 %v282, %v315
    %v381 = vmul.f32 %v282, %v319
    %v382 = vmul.f32 %v282, %v323
    %v383 = vmul.f32 %v282, %v327
    %v384 = vmul.f32 %v286, %v315
    %v385 = vmul.f32 %v286, %v319
    %v386 = vmul.f32 %v286, %v323
    %v387 = vmul.f32 %v286, %v327
    %v388 = vmul.f32 %v290, %v315
    %v389 = vmul.f32 %v290, %v319
    %v390 = vmul.f32 %v290, %v323
    %v391 = vmul.f32 %v290, %v327
    %v392 = vadd.f32 %v164, %v328
    %v393 = vadd.f32 %v165, %v329
    %v394 = vadd.f32 %v166, %v330
    %v395 = vadd.f32 %v167, %v331
    %v396 = vadd.f32 %v168, %v332
    %v397 = vadd.f32 %v169, %v333
    %v398 = vadd.f32 %v170, %v334
    %v399 = vadd.f32 %v171, %v335
    %v400 = vadd.f32 %v172, %v336
    %v401 = vadd.f32 %v173, %v337
    %v402 = vadd.f32 %v174, %v338
    %v403 = vadd.f32 %v175, %v339
    %v404 = vadd.f32 %v176, %v340
    %v405 = vadd.f32 %v177, %v341
    %v406 = vadd.f32 %v178, %v342
    %v407 = vadd.f32 %v179, %v343
    %v408 = vadd.f32 %v180, %v344
    %v409 = vadd.f32 %v181, %v345
    %v410 = vadd.f32 %v182, %v346
    %v411 = vadd.f32 %v183, %v347
    %v412 = vadd.f32 %v184, %v348
    %v413 = vadd.f32 %v185, %v349
    %v414 = vadd.f32 %v186, %v350
    %v415 = vadd.f32 %v187, %v351
    %v416 = vadd.f32 %v188, %v352
    %v417 = vadd.f32 %v189, %v353
    %v418 = vadd.f32 %v190, %v354
    %v419 = vadd.f32 %v191, %v355
    %v420 = vadd.f32 %v192, %v356
    %v421 = vadd.f32 %v193, %v357
    %v422 = vadd.f32 %v194, %v358
    %v423 = vadd.f32 %v195, %v359
    %v424 = vadd.f32 %v196, %v360
    %v425 = vadd.f32 %v197, %v361
    %v426 = vadd.f32 %v198, %v362
    %v427 = vadd.f32 %v199, %v363
    %v428 = vadd.f32 %v200, %v364
    %v429 = vadd.f32 %v201, %v365
    %v430 = vadd.f32 %v202, %v366
    %v431 = vadd.f32 %v203, %v367
    %v432 = vadd.f32 %v204, %v368
    %v433 = vadd.f32 %v205, %v369
    %v434 = vadd.f32 %v206, %v370
    %v435 = vadd.f32 %v207, %v371
    %v436 = vadd.f32 %v208, %v372
    %v437 = vadd.f32 %v209, %v373
    %v438 = vadd.f32 %v210, %v374
    %v439 = vadd.f32 %v211, %v375
    %v440 = vadd.f32 %v212, %v376
    %v441 = vadd.f32 %v213, %v377
    %v442 = vadd.f32 %v214, %v378
    %v443 = vadd.f32 %v215, %v379
    %v444 = vadd.f32 %v216, %v380
    %v445 = vadd.f32 %v217, %v381
    %v446 = vadd.f32 %v218, %v382
    %v447 = vadd.f32 %v219, %v383
    %v448 = vadd.f32 %v220, %v384
    %v449 = vadd.f32 %v221, %v385
    %v450 = vadd.f32 %v222, %v386
    %v451 = vadd.f32 %v223, %v387
    %v452 = vadd.f32 %v224, %v388
    %v453 = vadd.f32 %v225, %v389
    %v454 = vadd.f32 %v226, %v390
    %v455 = vadd.f32 %v227, %v391
    %456 = vset.pattern.permute.xlu0 2
    %457 = vperm.xlu0 %456, %v30
    %v458 = vpop.permute.xlu0 %457
    %460 = vset.pattern.permute.xlu0 2
    %461 = vperm.xlu0 %460, %v31
    %v462 = vpop.permute.xlu0 %461
    %464 = vset.pattern.permute.xlu0 2
    %465 = vperm.xlu0 %464, %v32
    %v466 = vpop.permute.xlu0 %465
    %468 = vset.pattern.permute.xlu0 2
    %469 = vperm.xlu0 %468, %v33
    %v470 = vpop.permute.xlu0 %469
    %472 = vset.pattern.permute.xlu0 2
    %473 = vperm.xlu0 %472, %v34
    %v474 = vpop.permute.xlu0 %473
    %476 = vset.pattern.permute.xlu0 2
    %477 = vperm.xlu0 %476, %v35
    %v478 = vpop.permute.xlu0 %477
    %480 = vset.pattern.permute.xlu0 2
    %481 = vperm.xlu0 %480, %v36
    %v482 = vpop.permute.xlu0 %481
    %484 = vset.pattern.permute.xlu0 2
    %485 = vperm.xlu0 %484, %v37
    %v486 = vpop.permute.xlu0 %485
    %488 = vset.pattern.permute.xlu0 2
    %489 = vperm.xlu0 %488, %v38
    %v490 = vpop.permute.xlu0 %489
    %492 = vset.pattern.permute.xlu0 2
    %493 = vperm.xlu0 %492, %v39
    %v494 = vpop.permute.xlu0 %493
    %496 = vset.pattern.permute.xlu0 2
    %497 = vperm.xlu0 %496, %v40
    %v498 = vpop.permute.xlu0 %497
    %500 = vset.pattern.permute.xlu0 2
    %501 = vperm.xlu0 %500, %v41
    %v502 = vpop.permute.xlu0 %501
    %504 = vset.pattern.permute.xlu0 2
    %505 = vperm.xlu0 %504, %v42
    %v506 = vpop.permute.xlu0 %505
    %508 = vset.pattern.permute.xlu0 2
    %509 = vperm.xlu0 %508, %v43
    %v510 = vpop.permute.xlu0 %509
    %512 = vset.pattern.permute.xlu0 2
    %513 = vperm.xlu0 %512, %v44
    %v514 = vpop.permute.xlu0 %513
    %516 = vset.pattern.permute.xlu0 2
    %517 = vperm.xlu0 %516, %v45
    %v518 = vpop.permute.xlu0 %517
    %v520 = vlaneseq
    %v521 = vshrl.u32 %v520, 7
    %v522 = vsub.s32 2, %v521
    %v523 = vrot.slane %v28, %v522
    %v524 = vlaneseq
    %v525 = vshrl.u32 %v524, 7
    %v526 = vsub.s32 6, %v525
    %v527 = vrot.slane %v28, %v526
    %v528 = vlaneseq
    %v529 = vshrl.u32 %v528, 7
    %v530 = vsub.s32 2, %v529
    %v531 = vrot.slane %v29, %v530
    %v532 = vlaneseq
    %v533 = vshrl.u32 %v532, 7
    %v534 = vsub.s32 6, %v533
    %v535 = vrot.slane %v29, %v534
    %v540 = vlaneseq
    %v541 = vshrl.u32 %v540, 7
    %v542 = vsub.s32 2, %v541
    %v543 = vrot.slane %v523, %v542
    %v544 = vlaneseq
    %v545 = vshrl.u32 %v544, 7
    %v546 = vsub.s32 2, %v545
    %v547 = vrot.slane %v527, %v546
    %v548 = vlaneseq
    %v549 = vshrl.u32 %v548, 7
    %v550 = vsub.s32 2, %v549
    %v551 = vrot.slane %v531, %v550
    %v552 = vlaneseq
    %v553 = vshrl.u32 %v552, 7
    %v554 = vsub.s32 2, %v553
    %v555 = vrot.slane %v535, %v554
    %v556 = vmul.f32 %v458, %v543
    %v557 = vmul.f32 %v458, %v547
    %v558 = vmul.f32 %v458, %v551
    %v559 = vmul.f32 %v458, %v555
    %v560 = vmul.f32 %v462, %v543
    %v561 = vmul.f32 %v462, %v547
    %v562 = vmul.f32 %v462, %v551
    %v563 = vmul.f32 %v462, %v555
    %v564 = vmul.f32 %v466, %v543
    %v565 = vmul.f32 %v466, %v547
    %v566 = vmul.f32 %v466, %v551
    %v567 = vmul.f32 %v466, %v555
    %v568 = vmul.f32 %v470, %v543
    %v569 = vmul.f32 %v470, %v547
    %v570 = vmul.f32 %v470, %v551
    %v571 = vmul.f32 %v470, %v555
    %v572 = vmul.f32 %v474, %v543
    %v573 = vmul.f32 %v474, %v547
    %v574 = vmul.f32 %v474, %v551
    %v575 = vmul.f32 %v474, %v555
    %v576 = vmul.f32 %v478, %v543
    %v577 = vmul.f32 %v478, %v547
    %v578 = vmul.f32 %v478, %v551
    %v579 = vmul.f32 %v478, %v555
    %v580 = vmul.f32 %v482, %v543
    %v581 = vmul.f32 %v482, %v547
    %v582 = vmul.f32 %v482, %v551
    %v583 = vmul.f32 %v482, %v555
    %v584 = vmul.f32 %v486, %v543
    %v585 = vmul.f32 %v486, %v547
    %v586 = vmul.f32 %v486, %v551
    %v587 = vmul.f32 %v486, %v555
    %v588 = vmul.f32 %v490, %v543
    %v589 = vmul.f32 %v490, %v547
    %v590 = vmul.f32 %v490, %v551
    %v591 = vmul.f32 %v490, %v555
    %v592 = vmul.f32 %v494, %v543
    %v593 = vmul.f32 %v494, %v547
    %v594 = vmul.f32 %v494, %v551
    %v595 = vmul.f32 %v494, %v555
    %v596 = vmul.f32 %v498, %v543
    %v597 = vmul.f32 %v498, %v547
    %v598 = vmul.f32 %v498, %v551
    %v599 = vmul.f32 %v498, %v555
    %v600 = vmul.f32 %v502, %v543
    %v601 = vmul.f32 %v502, %v547
    %v602 = vmul.f32 %v502, %v551
    %v603 = vmul.f32 %v502, %v555
    %v604 = vmul.f32 %v506, %v543
    %v605 = vmul.f32 %v506, %v547
    %v606 = vmul.f32 %v506, %v551
    %v607 = vmul.f32 %v506, %v555
    %v608 = vmul.f32 %v510, %v543
    %v609 = vmul.f32 %v510, %v547
    %v610 = vmul.f32 %v510, %v551
    %v611 = vmul.f32 %v510, %v555
    %v612 = vmul.f32 %v514, %v543
    %v613 = vmul.f32 %v514, %v547
    %v614 = vmul.f32 %v514, %v551
    %v615 = vmul.f32 %v514, %v555
    %v616 = vmul.f32 %v518, %v543
    %v617 = vmul.f32 %v518, %v547
    %v618 = vmul.f32 %v518, %v551
    %v619 = vmul.f32 %v518, %v555
    %v620 = vadd.f32 %v392, %v556
    %v621 = vadd.f32 %v393, %v557
    %v622 = vadd.f32 %v394, %v558
    %v623 = vadd.f32 %v395, %v559
    %v624 = vadd.f32 %v396, %v560
    %v625 = vadd.f32 %v397, %v561
    %v626 = vadd.f32 %v398, %v562
    %v627 = vadd.f32 %v399, %v563
    %v628 = vadd.f32 %v400, %v564
    %v629 = vadd.f32 %v401, %v565
    %v630 = vadd.f32 %v402, %v566
    %v631 = vadd.f32 %v403, %v567
    %v632 = vadd.f32 %v404, %v568
    %v633 = vadd.f32 %v405, %v569
    %v634 = vadd.f32 %v406, %v570
    %v635 = vadd.f32 %v407, %v571
    %v636 = vadd.f32 %v408, %v572
    %v637 = vadd.f32 %v409, %v573
    %v638 = vadd.f32 %v410, %v574
    %v639 = vadd.f32 %v411, %v575
    %v640 = vadd.f32 %v412, %v576
    %v641 = vadd.f32 %v413, %v577
    %v642 = vadd.f32 %v414, %v578
    %v643 = vadd.f32 %v415, %v579
    %v644 = vadd.f32 %v416, %v580
    %v645 = vadd.f32 %v417, %v581
    %v646 = vadd.f32 %v418, %v582
    %v647 = vadd.f32 %v419, %v583
    %v648 = vadd.f32 %v420, %v584
    %v649 = vadd.f32 %v421, %v585
    %v650 = vadd.f32 %v422, %v586
    %v651 = vadd.f32 %v423, %v587
    %v652 = vadd.f32 %v424, %v588
    %v653 = vadd.f32 %v425, %v589
    %v654 = vadd.f32 %v426, %v590
    %v655 = vadd.f32 %v427, %v591
    %v656 = vadd.f32 %v428, %v592
    %v657 = vadd.f32 %v429, %v593
    %v658 = vadd.f32 %v430, %v594
    %v659 = vadd.f32 %v431, %v595
    %v660 = vadd.f32 %v432, %v596
    %v661 = vadd.f32 %v433, %v597
    %v662 = vadd.f32 %v434, %v598
    %v663 = vadd.f32 %v435, %v599
    %v664 = vadd.f32 %v436, %v600
    %v665 = vadd.f32 %v437, %v601
    %v666 = vadd.f32 %v438, %v602
    %v667 = vadd.f32 %v439, %v603
    %v668 = vadd.f32 %v440, %v604
    %v669 = vadd.f32 %v441, %v605
    %v670 = vadd.f32 %v442, %v606
    %v671 = vadd.f32 %v443, %v607
    %v672 = vadd.f32 %v444, %v608
    %v673 = vadd.f32 %v445, %v609
    %v674 = vadd.f32 %v446, %v610
    %v675 = vadd.f32 %v447, %v611
    %v676 = vadd.f32 %v448, %v612
    %v677 = vadd.f32 %v449, %v613
    %v678 = vadd.f32 %v450, %v614
    %v679 = vadd.f32 %v451, %v615
    %v680 = vadd.f32 %v452, %v616
    %v681 = vadd.f32 %v453, %v617
    %v682 = vadd.f32 %v454, %v618
    %v683 = vadd.f32 %v455, %v619
    %v684 = vld [vmem:[%s2] sm:$0xff]
    %v685 = vld [vmem:[%s2 + $0x8] sm:$0xff]
    %v686 = vld [vmem:[%s2 + $0x10] sm:$0xff]
    %v687 = vld [vmem:[%s2 + $0x18] sm:$0xff]
    %v688 = vld [vmem:[%s2 + $0x20] sm:$0xff]
    %v689 = vld [vmem:[%s2 + $0x28] sm:$0xff]
    %v690 = vld [vmem:[%s2 + $0x30] sm:$0xff]
    %v691 = vld [vmem:[%s2 + $0x38] sm:$0xff]
    %v692 = vld [vmem:[%s2 + $0x40] sm:$0xff]
    %v693 = vld [vmem:[%s2 + $0x48] sm:$0xff]
    %v694 = vld [vmem:[%s2 + $0x50] sm:$0xff]
    %v695 = vld [vmem:[%s2 + $0x58] sm:$0xff]
    %v696 = vld [vmem:[%s2 + $0x60] sm:$0xff]
    %v697 = vld [vmem:[%s2 + $0x68] sm:$0xff]
    %v698 = vld [vmem:[%s2 + $0x70] sm:$0xff]
    %v699 = vld [vmem:[%s2 + $0x78] sm:$0xff]
    %701 = vset.pattern.permute.xlu0 0
    %702 = vperm.xlu0 %701, %v684
    %v703 = vpop.permute.xlu0 %702
    %706 = vset.pattern.permute.xlu0 0
    %707 = vperm.xlu0 %706, %v685
    %v708 = vpop.permute.xlu0 %707
    %711 = vset.pattern.permute.xlu0 0
    %712 = vperm.xlu0 %711, %v686
    %v713 = vpop.permute.xlu0 %712
    %716 = vset.pattern.permute.xlu0 0
    %717 = vperm.xlu0 %716, %v687
    %v718 = vpop.permute.xlu0 %717
    %721 = vset.pattern.permute.xlu0 0
    %722 = vperm.xlu0 %721, %v688
    %v723 = vpop.permute.xlu0 %722
    %726 = vset.pattern.permute.xlu0 0
    %727 = vperm.xlu0 %726, %v689
    %v728 = vpop.permute.xlu0 %727
    %731 = vset.pattern.permute.xlu0 0
    %732 = vperm.xlu0 %731, %v690
    %v733 = vpop.permute.xlu0 %732
    %736 = vset.pattern.permute.xlu0 0
    %737 = vperm.xlu0 %736, %v691
    %v738 = vpop.permute.xlu0 %737
    %741 = vset.pattern.permute.xlu0 0
    %742 = vperm.xlu0 %741, %v692
    %v743 = vpop.permute.xlu0 %742
    %746 = vset.pattern.permute.xlu0 0
    %747 = vperm.xlu0 %746, %v693
    %v748 = vpop.permute.xlu0 %747
    %751 = vset.pattern.permute.xlu0 0
    %752 = vperm.xlu0 %751, %v694
    %v753 = vpop.permute.xlu0 %752
    %756 = vset.pattern.permute.xlu0 0
    %757 = vperm.xlu0 %756, %v695
    %v758 = vpop.permute.xlu0 %757
    %761 = vset.pattern.permute.xlu0 0
    %762 = vperm.xlu0 %761, %v696
    %v763 = vpop.permute.xlu0 %762
    %766 = vset.pattern.permute.xlu0 0
    %767 = vperm.xlu0 %766, %v697
    %v768 = vpop.permute.xlu0 %767
    %771 = vset.pattern.permute.xlu0 0
    %772 = vperm.xlu0 %771, %v698
    %v773 = vpop.permute.xlu0 %772
    %776 = vset.pattern.permute.xlu0 0
    %777 = vperm.xlu0 %776, %v699
    %v778 = vpop.permute.xlu0 %777
    %v780 = vadd.f32 %v620, %v703
    %v781 = vadd.f32 %v621, %v703
    %v782 = vadd.f32 %v622, %v703
    %v783 = vadd.f32 %v623, %v703
    %v784 = vadd.f32 %v624, %v708
    %v785 = vadd.f32 %v625, %v708
    %v786 = vadd.f32 %v626, %v708
    %v787 = vadd.f32 %v627, %v708
    %v788 = vadd.f32 %v628, %v713
    %v789 = vadd.f32 %v629, %v713
    %v790 = vadd.f32 %v630, %v713
    %v791 = vadd.f32 %v631, %v713
    %v792 = vadd.f32 %v632, %v718
    %v793 = vadd.f32 %v633, %v718
    %v794 = vadd.f32 %v634, %v718
    %v795 = vadd.f32 %v635, %v718
    %v796 = vadd.f32 %v636, %v723
    %v797 = vadd.f32 %v637, %v723
    %v798 = vadd.f32 %v638, %v723
    %v799 = vadd.f32 %v639, %v723
    %v800 = vadd.f32 %v640, %v728
    %v801 = vadd.f32 %v641, %v728
    %v802 = vadd.f32 %v642, %v728
    %v803 = vadd.f32 %v643, %v728
    %v804 = vadd.f32 %v644, %v733
    %v805 = vadd.f32 %v645, %v733
    %v806 = vadd.f32 %v646, %v733
    %v807 = vadd.f32 %v647, %v733
    %v808 = vadd.f32 %v648, %v738
    %v809 = vadd.f32 %v649, %v738
    %v810 = vadd.f32 %v650, %v738
    %v811 = vadd.f32 %v651, %v738
    %v812 = vadd.f32 %v652, %v743
    %v813 = vadd.f32 %v653, %v743
    %v814 = vadd.f32 %v654, %v743
    %v815 = vadd.f32 %v655, %v743
    %v816 = vadd.f32 %v656, %v748
    %v817 = vadd.f32 %v657, %v748
    %v818 = vadd.f32 %v658, %v748
    %v819 = vadd.f32 %v659, %v748
    %v820 = vadd.f32 %v660, %v753
    %v821 = vadd.f32 %v661, %v753
    %v822 = vadd.f32 %v662, %v753
    %v823 = vadd.f32 %v663, %v753
    %v824 = vadd.f32 %v664, %v758
    %v825 = vadd.f32 %v665, %v758
    %v826 = vadd.f32 %v666, %v758
    %v827 = vadd.f32 %v667, %v758
    %v828 = vadd.f32 %v668, %v763
    %v829 = vadd.f32 %v669, %v763
    %v830 = vadd.f32 %v670, %v763
    %v831 = vadd.f32 %v671, %v763
    %v832 = vadd.f32 %v672, %v768
    %v833 = vadd.f32 %v673, %v768
    %v834 = vadd.f32 %v674, %v768
    %v835 = vadd.f32 %v675, %v768
    %v836 = vadd.f32 %v676, %v773
    %v837 = vadd.f32 %v677, %v773
    %v838 = vadd.f32 %v678, %v773
    %v839 = vadd.f32 %v679, %v773
    %v840 = vadd.f32 %v680, %v778
    %v841 = vadd.f32 %v681, %v778
    %v842 = vadd.f32 %v682, %v778
    %v843 = vadd.f32 %v683, %v778
    %v844 = vmax.f32 %v780, 0.0
    %v845 = vmax.f32 %v781, 0.0
    %v846 = vmax.f32 %v782, 0.0
    %v847 = vmax.f32 %v783, 0.0
    %v848 = vmax.f32 %v784, 0.0
    %v849 = vmax.f32 %v785, 0.0
    %v850 = vmax.f32 %v786, 0.0
    %v851 = vmax.f32 %v787, 0.0
    %v852 = vmax.f32 %v788, 0.0
    %v853 = vmax.f32 %v789, 0.0
    %v854 = vmax.f32 %v790, 0.0
    %v855 = vmax.f32 %v791, 0.0
    %v856 = vmax.f32 %v792, 0.0
    %v857 = vmax.f32 %v793, 0.0
    %v858 = vmax.f32 %v794, 0.0
    %v859 = vmax.f32 %v795, 0.0
    %v860 = vmax.f32 %v796, 0.0
    %v861 = vmax.f32 %v797, 0.0
    %v862 = vmax.f32 %v798, 0.0
    %v863 = vmax.f32 %v799, 0.0
    %v864 = vmax.f32 %v800, 0.0
    %v865 = vmax.f32 %v801, 0.0
    %v866 = vmax.f32 %v802, 0.0
    %v867 = vmax.f32 %v803, 0.0
    %v868 = vmax.f32 %v804, 0.0
    %v869 = vmax.f32 %v805, 0.0
    %v870 = vmax.f32 %v806, 0.0
    %v871 = vmax.f32 %v807, 0.0
    %v872 = vmax.f32 %v808, 0.0
    %v873 = vmax.f32 %v809, 0.0
    %v874 = vmax.f32 %v810, 0.0
    %v875 = vmax.f32 %v811, 0.0
    %v876 = vmax.f32 %v812, 0.0
    %v877 = vmax.f32 %v813, 0.0
    %v878 = vmax.f32 %v814, 0.0
    %v879 = vmax.f32 %v815, 0.0
    %v880 = vmax.f32 %v816, 0.0
    %v881 = vmax.f32 %v817, 0.0
    %v882 = vmax.f32 %v818, 0.0
    %v883 = vmax.f32 %v819, 0.0
    %v884 = vmax.f32 %v820, 0.0
    %v885 = vmax.f32 %v821, 0.0
    %v886 = vmax.f32 %v822, 0.0
    %v887 = vmax.f32 %v823, 0.0
    %v888 = vmax.f32 %v824, 0.0
    %v889 = vmax.f32 %v825, 0.0
    %v890 = vmax.f32 %v826, 0.0
    %v891 = vmax.f32 %v827, 0.0
    %v892 = vmax.f32 %v828, 0.0
    %v893 = vmax.f32 %v829, 0.0
    %v894 = vmax.f32 %v830, 0.0
    %v895 = vmax.f32 %v831, 0.0
    %v896 = vmax.f32 %v832, 0.0
    %v897 = vmax.f32 %v833, 0.0
    %v898 = vmax.f32 %v834, 0.0
    %v899 = vmax.f32 %v835, 0.0
    %v900 = vmax.f32 %v836, 0.0
    %v901 = vmax.f32 %v837, 0.0
    %v902 = vmax.f32 %v838, 0.0
    %v903 = vmax.f32 %v839, 0.0
    %v904 = vmax.f32 %v840, 0.0
    %v905 = vmax.f32 %v841, 0.0
    %v906 = vmax.f32 %v842, 0.0
    %v907 = vmax.f32 %v843, 0.0
    %v908 = vld [vmem:[%s3] sm:$0xff]
    %v909 = vld [vmem:[%s3 + $0x8] sm:$0xff]
    %v910 = vld [vmem:[%s3 + $0x10] sm:$0xff]
    %v911 = vld [vmem:[%s3 + $0x18] sm:$0xff]
    %v912 = vld [vmem:[%s3 + $0x20] sm:$0xff]
    %v913 = vld [vmem:[%s3 + $0x28] sm:$0xff]
    %v914 = vld [vmem:[%s3 + $0x30] sm:$0xff]
    %v915 = vld [vmem:[%s3 + $0x38] sm:$0xff]
    %v916 = vld [vmem:[%s3 + $0x40] sm:$0xff]
    %v917 = vld [vmem:[%s3 + $0x48] sm:$0xff]
    %v918 = vld [vmem:[%s3 + $0x50] sm:$0xff]
    %v919 = vld [vmem:[%s3 + $0x58] sm:$0xff]
    %v920 = vld [vmem:[%s3 + $0x60] sm:$0xff]
    %v921 = vld [vmem:[%s3 + $0x68] sm:$0xff]
    %v922 = vld [vmem:[%s3 + $0x70] sm:$0xff]
    %v923 = vld [vmem:[%s3 + $0x78] sm:$0xff]
    %v924 = vld [vmem:[%s4] sm:$0xff]
    %v925 = vld [vmem:[%s4 + $0x8] sm:$0xff]
    %v926 = vld [vmem:[%s4 + $0x10] sm:$0xff]
    %v927 = vld [vmem:[%s4 + $0x18] sm:$0xff]
    %v928 = vld [vmem:[%s4 + $0x20] sm:$0xff]
    %v929 = vld [vmem:[%s4 + $0x28] sm:$0xff]
    %v930 = vld [vmem:[%s4 + $0x30] sm:$0xff]
    %v931 = vld [vmem:[%s4 + $0x38] sm:$0xff]
    %v932 = vld [vmem:[%s4 + $0x40] sm:$0xff]
    %v933 = vld [vmem:[%s4 + $0x48] sm:$0xff]
    %v934 = vld [vmem:[%s4 + $0x50] sm:$0xff]
    %v935 = vld [vmem:[%s4 + $0x58] sm:$0xff]
    %v936 = vld [vmem:[%s4 + $0x60] sm:$0xff]
    %v937 = vld [vmem:[%s4 + $0x68] sm:$0xff]
    %v938 = vld [vmem:[%s4 + $0x70] sm:$0xff]
    %v939 = vld [vmem:[%s4 + $0x78] sm:$0xff]
    %941 = vset.pattern.permute.xlu0 0
    %942 = vperm.xlu0 %941, %v924
    %v943 = vpop.permute.xlu0 %942
    %946 = vset.pattern.permute.xlu0 0
    %947 = vperm.xlu0 %946, %v925
    %v948 = vpop.permute.xlu0 %947
    %951 = vset.pattern.permute.xlu0 0
    %952 = vperm.xlu0 %951, %v926
    %v953 = vpop.permute.xlu0 %952
    %956 = vset.pattern.permute.xlu0 0
    %957 = vperm.xlu0 %956, %v927
    %v958 = vpop.permute.xlu0 %957
    %961 = vset.pattern.permute.xlu0 0
    %962 = vperm.xlu0 %961, %v928
    %v963 = vpop.permute.xlu0 %962
    %966 = vset.pattern.permute.xlu0 0
    %967 = vperm.xlu0 %966, %v929
    %v968 = vpop.permute.xlu0 %967
    %971 = vset.pattern.permute.xlu0 0
    %972 = vperm.xlu0 %971, %v930
    %v973 = vpop.permute.xlu0 %972
    %976 = vset.pattern.permute.xlu0 0
    %977 = vperm.xlu0 %976, %v931
    %v978 = vpop.permute.xlu0 %977
    %981 = vset.pattern.permute.xlu0 0
    %982 = vperm.xlu0 %981, %v932
    %v983 = vpop.permute.xlu0 %982
    %986 = vset.pattern.permute.xlu0 0
    %987 = vperm.xlu0 %986, %v933
    %v988 = vpop.permute.xlu0 %987
    %991 = vset.pattern.permute.xlu0 0
    %992 = vperm.xlu0 %991, %v934
    %v993 = vpop.permute.xlu0 %992
    %996 = vset.pattern.permute.xlu0 0
    %997 = vperm.xlu0 %996, %v935
    %v998 = vpop.permute.xlu0 %997
    %1001 = vset.pattern.permute.xlu0 0
    %1002 = vperm.xlu0 %1001, %v936
    %v1003 = vpop.permute.xlu0 %1002
    %1006 = vset.pattern.permute.xlu0 0
    %1007 = vperm.xlu0 %1006, %v937
    %v1008 = vpop.permute.xlu0 %1007
    %1011 = vset.pattern.permute.xlu0 0
    %1012 = vperm.xlu0 %1011, %v938
    %v1013 = vpop.permute.xlu0 %1012
    %1016 = vset.pattern.permute.xlu0 0
    %1017 = vperm.xlu0 %1016, %v939
    %v1018 = vpop.permute.xlu0 %1017
    %1020 = vmatprep.subr.mxu0 %v905
    %1021 = vmatpush1.msra.mxu0 %v904
    %1022 = vmatprep.subr.mxu0 %v901
    %1023 = vmatpush1.msra.mxu0 %v900
    %1024 = vmatprep.subr.mxu0 %v897
    %1025 = vmatpush1.msra.mxu0 %v896
    %1026 = vmatprep.subr.mxu0 %v893
    %1027 = vmatpush1.msra.mxu0 %v892
    %1028 = vmatprep.subr.mxu0 %v889
    %1029 = vmatpush1.msra.mxu0 %v888
    %1030 = vmatprep.subr.mxu0 %v885
    %1031 = vmatpush1.msra.mxu0 %v884
    %1032 = vmatprep.subr.mxu0 %v881
    %1033 = vmatpush1.msra.mxu0 %v880
    %1034 = vmatprep.subr.mxu0 %v877
    %1035 = vmatpush1.msra.mxu0 %v876
    %1036 = vmatprep.subr.mxu0 %v873
    %1037 = vmatpush1.msra.mxu0 %v872
    %1038 = vmatprep.subr.mxu0 %v869
    %1039 = vmatpush1.msra.mxu0 %v868
    %1040 = vmatprep.subr.mxu0 %v865
    %1041 = vmatpush1.msra.mxu0 %v864
    %1042 = vmatprep.subr.mxu0 %v861
    %1043 = vmatpush1.msra.mxu0 %v860
    %1044 = vmatprep.subr.mxu0 %v857
    %1045 = vmatpush1.msra.mxu0 %v856
    %1046 = vmatprep.subr.mxu0 %v853
    %1047 = vmatpush1.msra.mxu0 %v852
    %1048 = vmatprep.subr.mxu0 %v849
    %1049 = vmatpush1.msra.mxu0 %v848
    %1050 = vmatprep.subr.mxu0 %v845
    %1051 = vmatpush1.msra.mxu0 %v844
    %1052 = vmatprep.subr.mxu0 0.0
    %1053 = vmatpush2.msra.mxu0 0.0
    %1054 = vmatprep.subr.mxu0 0.0
    %1055 = vmatpush2.msra.mxu0 0.0
    %1056 = vmatprep.subr.mxu0 0.0
    %1057 = vmatpush2.msra.mxu0 0.0
    %1058 = vmatprep.subr.mxu0 0.0
    %1059 = vmatpush2.msra.mxu0 0.0
    %1060 = vmatprep.subr.mxu0 0.0
    %1061 = vmatpush2.msra.mxu0 0.0
    %1062 = vmatprep.subr.mxu0 0.0
    %1063 = vmatpush2.msra.mxu0 0.0
    %1064 = vmatprep.subr.mxu0 0.0
    %1065 = vmatpush2.msra.mxu0 0.0
    %1066 = vmatprep.subr.mxu0 0.0
    %1067 = vmatpush2.msra.mxu0 0.0
    %1068 = vmatprep.subr.mxu0 0.0
    %1069 = vmatpush2.msra.mxu0 0.0
    %1070 = vmatprep.subr.mxu0 0.0
    %1071 = vmatpush2.msra.mxu0 0.0
    %1072 = vmatprep.subr.mxu0 0.0
    %1073 = vmatpush2.msra.mxu0 0.0
    %1074 = vmatprep.subr.mxu0 0.0
    %1075 = vmatpush2.msra.mxu0 0.0
    %1076 = vmatprep.subr.mxu0 0.0
    %1077 = vmatpush2.msra.mxu0 0.0
    %1078 = vmatprep.subr.mxu0 0.0
    %1079 = vmatpush2.msra.mxu0 0.0
    %1080 = vmatprep.subr.mxu0 0.0
    %1081 = vmatpush2.msra.mxu0 0.0
    %1082 = vmatprep.subr.mxu0 0.0
    %1083 = vmatpush2.msra.mxu0 0.0
    %1084 = vmatprep.mubr.f32.mxu0 0.0
    %1085 = vmatmul.mubr.f32.gmra.mxu0 %v908
    %v1086 = vpop.f32.mrf.mxu0
    %v1087 = vadd.f32 %v943, %v1086
    %v1088 = vpop.f32.mrf.mxu0
    %v1089 = vadd.f32 %v943, %v1088
    %1090 = vmatprep.mubr.f32.mxu0 0.0
    %1091 = vmatmul.mubr.f32.gmra.mxu0 %v909
    %v1092 = vpop.f32.mrf.mxu0
    %v1093 = vadd.f32 %v948, %v1092
    %v1094 = vpop.f32.mrf.mxu0
    %v1095 = vadd.f32 %v948, %v1094
    %1096 = vmatprep.mubr.f32.mxu0 0.0
    %1097 = vmatmul.mubr.f32.gmra.mxu0 %v910
    %v1098 = vpop.f32.mrf.mxu0
    %v1099 = vadd.f32 %v953, %v1098
    %v1100 = vpop.f32.mrf.mxu0
    %v1101 = vadd.f32 %v953, %v1100
    %1102 = vmatprep.mubr.f32.mxu0 0.0
    %1103 = vmatmul.mubr.f32.gmra.mxu0 %v911
    %v1104 = vpop.f32.mrf.mxu0
    %v1105 = vadd.f32 %v958, %v1104
    %v1106 = vpop.f32.mrf.mxu0
    %v1107 = vadd.f32 %v958, %v1106
    %1108 = vmatprep.mubr.f32.mxu0 0.0
    %1109 = vmatmul.mubr.f32.gmra.mxu0 %v912
    %v1110 = vpop.f32.mrf.mxu0
    %v1111 = vadd.f32 %v963, %v1110
    %v1112 = vpop.f32.mrf.mxu0
    %v1113 = vadd.f32 %v963, %v1112
    %1114 = vmatprep.mubr.f32.mxu0 0.0
    %1115 = vmatmul.mubr.f32.gmra.mxu0 %v913
    %v1116 = vpop.f32.mrf.mxu0
    %v1117 = vadd.f32 %v968, %v1116
    %v1118 = vpop.f32.mrf.mxu0
    %v1119 = vadd.f32 %v968, %v1118
    %1120 = vmatprep.mubr.f32.mxu0 0.0
    %1121 = vmatmul.mubr.f32.gmra.mxu0 %v914
    %v1122 = vpop.f32.mrf.mxu0
    %v1123 = vadd.f32 %v973, %v1122
    %v1124 = vpop.f32.mrf.mxu0
    %v1125 = vadd.f32 %v973, %v1124
    %1126 = vmatprep.mubr.f32.mxu0 0.0
    %1127 = vmatmul.mubr.f32.gmra.mxu0 %v915
    %v1128 = vpop.f32.mrf.mxu0
    %v1129 = vadd.f32 %v978, %v1128
    %v1130 = vpop.f32.mrf.mxu0
    %v1131 = vadd.f32 %v978, %v1130
    %1132 = vmatprep.mubr.f32.mxu0 0.0
    %1133 = vmatmul.mubr.f32.gmra.mxu0 %v916
    %v1134 = vpop.f32.mrf.mxu0
    %v1135 = vadd.f32 %v983, %v1134
    %v1136 = vpop.f32.mrf.mxu0
    %v1137 = vadd.f32 %v983, %v1136
    %1138 = vmatprep.mubr.f32.mxu0 0.0
    %1139 = vmatmul.mubr.f32.gmra.mxu0 %v917
    %v1140 = vpop.f32.mrf.mxu0
    %v1141 = vadd.f32 %v988, %v1140
    %v1142 = vpop.f32.mrf.mxu0
    %v1143 = vadd.f32 %v988, %v1142
    %1144 = vmatprep.mubr.f32.mxu0 0.0
    %1145 = vmatmul.mubr.f32.gmra.mxu0 %v918
    %v1146 = vpop.f32.mrf.mxu0
    %v1147 = vadd.f32 %v993, %v1146
    %v1148 = vpop.f32.mrf.mxu0
    %v1149 = vadd.f32 %v993, %v1148
    %1150 = vmatprep.mubr.f32.mxu0 0.0
    %1151 = vmatmul.mubr.f32.gmra.mxu0 %v919
    %v1152 = vpop.f32.mrf.mxu0
    %v1153 = vadd.f32 %v998, %v1152
    %v1154 = vpop.f32.mrf.mxu0
    %v1155 = vadd.f32 %v998, %v1154
    %1156 = vmatprep.mubr.f32.mxu0 0.0
    %1157 = vmatmul.mubr.f32.gmra.mxu0 %v920
    %v1158 = vpop.f32.mrf.mxu0
    %v1159 = vadd.f32 %v1003, %v1158
    %v1160 = vpop.f32.mrf.mxu0
    %v1161 = vadd.f32 %v1003, %v1160
    %1162 = vmatprep.mubr.f32.mxu0 0.0
    %1163 = vmatmul.mubr.f32.gmra.mxu0 %v921
    %v1164 = vpop.f32.mrf.mxu0
    %v1165 = vadd.f32 %v1008, %v1164
    %v1166 = vpop.f32.mrf.mxu0
    %v1167 = vadd.f32 %v1008, %v1166
    %1168 = vmatprep.mubr.f32.mxu0 0.0
    %1169 = vmatmul.mubr.f32.gmra.mxu0 %v922
    %v1170 = vpop.f32.mrf.mxu0
    %v1171 = vadd.f32 %v1013, %v1170
    %v1172 = vpop.f32.mrf.mxu0
    %v1173 = vadd.f32 %v1013, %v1172
    %1174 = vmatprep.mubr.f32.mxu0 0.0
    %1175 = vmatmul.mubr.f32.gmra.mxu0 %v923
    %v1176 = vpop.f32.mrf.mxu0
    %v1177 = vadd.f32 %v1018, %v1176
    %v1178 = vpop.f32.mrf.mxu0
    %v1179 = vadd.f32 %v1018, %v1178
    %1180 = vdwg.mxu0
    %1181 = vmatprep.subr.mxu0 %v907
    %1182 = vmatpush1.msra.mxu0 %v906
    %1183 = vmatprep.subr.mxu0 %v903
    %1184 = vmatpush1.msra.mxu0 %v902
    %1185 = vmatprep.subr.mxu0 %v899
    %1186 = vmatpush1.msra.mxu0 %v898
    %1187 = vmatprep.subr.mxu0 %v895
    %1188 = vmatpush1.msra.mxu0 %v894
    %1189 = vmatprep.subr.mxu0 %v891
    %1190 = vmatpush1.msra.mxu0 %v890
    %1191 = vmatprep.subr.mxu0 %v887
    %1192 = vmatpush1.msra.mxu0 %v886
    %1193 = vmatprep.subr.mxu0 %v883
    %1194 = vmatpush1.msra.mxu0 %v882
    %1195 = vmatprep.subr.mxu0 %v879
    %1196 = vmatpush1.msra.mxu0 %v878
    %1197 = vmatprep.subr.mxu0 %v875
    %1198 = vmatpush1.msra.mxu0 %v874
    %1199 = vmatprep.subr.mxu0 %v871
    %1200 = vmatpush1.msra.mxu0 %v870
    %1201 = vmatprep.subr.mxu0 %v867
    %1202 = vmatpush1.msra.mxu0 %v866
    %1203 = vmatprep.subr.mxu0 %v863
    %1204 = vmatpush1.msra.mxu0 %v862
    %1205 = vmatprep.subr.mxu0 %v859
    %1206 = vmatpush1.msra.mxu0 %v858
    %1207 = vmatprep.subr.mxu0 %v855
    %1208 = vmatpush1.msra.mxu0 %v854
    %1209 = vmatprep.subr.mxu0 %v851
    %1210 = vmatpush1.msra.mxu0 %v850
    %1211 = vmatprep.subr.mxu0 %v847
    %1212 = vmatpush1.msra.mxu0 %v846
    %1213 = vmatprep.subr.mxu0 0.0
    %1214 = vmatpush2.msra.mxu0 0.0
    %1215 = vmatprep.subr.mxu0 0.0
    %1216 = vmatpush2.msra.mxu0 0.0
    %1217 = vmatprep.subr.mxu0 0.0
    %1218 = vmatpush2.msra.mxu0 0.0
    %1219 = vmatprep.subr.mxu0 0.0
    %1220 = vmatpush2.msra.mxu0 0.0
    %1221 = vmatprep.subr.mxu0 0.0
    %1222 = vmatpush2.msra.mxu0 0.0
    %1223 = vmatprep.subr.mxu0 0.0
    %1224 = vmatpush2.msra.mxu0 0.0
    %1225 = vmatprep.subr.mxu0 0.0
    %1226 = vmatpush2.msra.mxu0 0.0
    %1227 = vmatprep.subr.mxu0 0.0
    %1228 = vmatpush2.msra.mxu0 0.0
    %1229 = vmatprep.subr.mxu0 0.0
    %1230 = vmatpush2.msra.mxu0 0.0
    %1231 = vmatprep.subr.mxu0 0.0
    %1232 = vmatpush2.msra.mxu0 0.0
    %1233 = vmatprep.subr.mxu0 0.0
    %1234 = vmatpush2.msra.mxu0 0.0
    %1235 = vmatprep.subr.mxu0 0.0
    %1236 = vmatpush2.msra.mxu0 0.0
    %1237 = vmatprep.subr.mxu0 0.0
    %1238 = vmatpush2.msra.mxu0 0.0
    %1239 = vmatprep.subr.mxu0 0.0
    %1240 = vmatpush2.msra.mxu0 0.0
    %1241 = vmatprep.subr.mxu0 0.0
    %1242 = vmatpush2.msra.mxu0 0.0
    %1243 = vmatprep.subr.mxu0 0.0
    %1244 = vmatpush2.msra.mxu0 0.0
    %1245 = vmatprep.mubr.f32.mxu0 0.0
    %1246 = vmatmul.mubr.f32.gmra.mxu0 %v908
    %v1247 = vpop.f32.mrf.mxu0
    %v1248 = vadd.f32 %v943, %v1247
    %v1249 = vpop.f32.mrf.mxu0
    %v1250 = vadd.f32 %v943, %v1249
    %1251 = vmatprep.mubr.f32.mxu0 0.0
    %1252 = vmatmul.mubr.f32.gmra.mxu0 %v909
    %v1253 = vpop.f32.mrf.mxu0
    %v1254 = vadd.f32 %v948, %v1253
    %v1255 = vpop.f32.mrf.mxu0
    %v1256 = vadd.f32 %v948, %v1255
    %1257 = vmatprep.mubr.f32.mxu0 0.0
    %1258 = vmatmul.mubr.f32.gmra.mxu0 %v910
    %v1259 = vpop.f32.mrf.mxu0
    %v1260 = vadd.f32 %v953, %v1259
    %v1261 = vpop.f32.mrf.mxu0
    %v1262 = vadd.f32 %v953, %v1261
    %1263 = vmatprep.mubr.f32.mxu0 0.0
    %1264 = vmatmul.mubr.f32.gmra.mxu0 %v911
    %v1265 = vpop.f32.mrf.mxu0
    %v1266 = vadd.f32 %v958, %v1265
    %v1267 = vpop.f32.mrf.mxu0
    %v1268 = vadd.f32 %v958, %v1267
    %1269 = vmatprep.mubr.f32.mxu0 0.0
    %1270 = vmatmul.mubr.f32.gmra.mxu0 %v912
    %v1271 = vpop.f32.mrf.mxu0
    %v1272 = vadd.f32 %v963, %v1271
    %v1273 = vpop.f32.mrf.mxu0
    %v1274 = vadd.f32 %v963, %v1273
    %1275 = vmatprep.mubr.f32.mxu0 0.0
    %1276 = vmatmul.mubr.f32.gmra.mxu0 %v913
    %v1277 = vpop.f32.mrf.mxu0
    %v1278 = vadd.f32 %v968, %v1277
    %v1279 = vpop.f32.mrf.mxu0
    %v1280 = vadd.f32 %v968, %v1279
    %1281 = vmatprep.mubr.f32.mxu0 0.0
    %1282 = vmatmul.mubr.f32.gmra.mxu0 %v914
    %v1283 = vpop.f32.mrf.mxu0
    %v1284 = vadd.f32 %v973, %v1283
    %v1285 = vpop.f32.mrf.mxu0
    %v1286 = vadd.f32 %v973, %v1285
    %1287 = vmatprep.mubr.f32.mxu0 0.0
    %1288 = vmatmul.mubr.f32.gmra.mxu0 %v915
    %v1289 = vpop.f32.mrf.mxu0
    %v1290 = vadd.f32 %v978, %v1289
    %v1291 = vpop.f32.mrf.mxu0
    %v1292 = vadd.f32 %v978, %v1291
    %1293 = vmatprep.mubr.f32.mxu0 0.0
    %1294 = vmatmul.mubr.f32.gmra.mxu0 %v916
    %v1295 = vpop.f32.mrf.mxu0
    %v1296 = vadd.f32 %v983, %v1295
    %v1297 = vpop.f32.mrf.mxu0
    %v1298 = vadd.f32 %v983, %v1297
    %1299 = vmatprep.mubr.f32.mxu0 0.0
    %1300 = vmatmul.mubr.f32.gmra.mxu0 %v917
    %v1301 = vpop.f32.mrf.mxu0
    %v1302 = vadd.f32 %v988, %v1301
    %v1303 = vpop.f32.mrf.mxu0
    %v1304 = vadd.f32 %v988, %v1303
    %1305 = vmatprep.mubr.f32.mxu0 0.0
    %1306 = vmatmul.mubr.f32.gmra.mxu0 %v918
    %v1307 = vpop.f32.mrf.mxu0
    %v1308 = vadd.f32 %v993, %v1307
    %v1309 = vpop.f32.mrf.mxu0
    %v1310 = vadd.f32 %v993, %v1309
    %1311 = vmatprep.mubr.f32.mxu0 0.0
    %1312 = vmatmul.mubr.f32.gmra.mxu0 %v919
    %v1313 = vpop.f32.mrf.mxu0
    %v1314 = vadd.f32 %v998, %v1313
    %v1315 = vpop.f32.mrf.mxu0
    %v1316 = vadd.f32 %v998, %v1315
    %1317 = vmatprep.mubr.f32.mxu0 0.0
    %1318 = vmatmul.mubr.f32.gmra.mxu0 %v920
    %v1319 = vpop.f32.mrf.mxu0
    %v1320 = vadd.f32 %v1003, %v1319
    %v1321 = vpop.f32.mrf.mxu0
    %v1322 = vadd.f32 %v1003, %v1321
    %1323 = vmatprep.mubr.f32.mxu0 0.0
    %1324 = vmatmul.mubr.f32.gmra.mxu0 %v921
    %v1325 = vpop.f32.mrf.mxu0
    %v1326 = vadd.f32 %v1008, %v1325
    %v1327 = vpop.f32.mrf.mxu0
    %v1328 = vadd.f32 %v1008, %v1327
    %1329 = vmatprep.mubr.f32.mxu0 0.0
    %1330 = vmatmul.mubr.f32.gmra.mxu0 %v922
    %v1331 = vpop.f32.mrf.mxu0
    %v1332 = vadd.f32 %v1013, %v1331
    %v1333 = vpop.f32.mrf.mxu0
    %v1334 = vadd.f32 %v1013, %v1333
    %1335 = vmatprep.mubr.f32.mxu0 0.0
    %1336 = vmatmul.mubr.f32.gmra.mxu0 %v923
    %v1337 = vpop.f32.mrf.mxu0
    %v1338 = vadd.f32 %v1018, %v1337
    %v1339 = vpop.f32.mrf.mxu0
    %v1340 = vadd.f32 %v1018, %v1339
    %1341 = vdwg.mxu0
    %v1342 = vmax.f32 %v1087, 0.0
    %v1343 = vmax.f32 %v1089, 0.0
    %v1344 = vmax.f32 %v1248, 0.0
    %v1345 = vmax.f32 %v1250, 0.0
    %v1346 = vmax.f32 %v1093, 0.0
    %v1347 = vmax.f32 %v1095, 0.0
    %v1348 = vmax.f32 %v1254, 0.0
    %v1349 = vmax.f32 %v1256, 0.0
    %v1350 = vmax.f32 %v1099, 0.0
    %v1351 = vmax.f32 %v1101, 0.0
    %v1352 = vmax.f32 %v1260, 0.0
    %v1353 = vmax.f32 %v1262, 0.0
    %v1354 = vmax.f32 %v1105, 0.0
    %v1355 = vmax.f32 %v1107, 0.0
    %v1356 = vmax.f32 %v1266, 0.0
    %v1357 = vmax.f32 %v1268, 0.0
    %v1358 = vmax.f32 %v1111, 0.0
    %v1359 = vmax.f32 %v1113, 0.0
    %v1360 = vmax.f32 %v1272, 0.0
    %v1361 = vmax.f32 %v1274, 0.0
    %v1362 = vmax.f32 %v1117, 0.0
    %v1363 = vmax.f32 %v1119, 0.0
    %v1364 = vmax.f32 %v1278, 0.0
    %v1365 = vmax.f32 %v1280, 0.0
    %v1366 = vmax.f32 %v1123, 0.0
    %v1367 = vmax.f32 %v1125, 0.0
    %v1368 = vmax.f32 %v1284, 0.0
    %v1369 = vmax.f32 %v1286, 0.0
    %v1370 = vmax.f32 %v1129, 0.0
    %v1371 = vmax.f32 %v1131, 0.0
    %v1372 = vmax.f32 %v1290, 0.0
    %v1373 = vmax.f32 %v1292, 0.0
    %v1374 = vmax.f32 %v1135, 0.0
    %v1375 = vmax.f32 %v1137, 0.0
    %v1376 = vmax.f32 %v1296, 0.0
    %v1377 = vmax.f32 %v1298, 0.0
    %v1378 = vmax.f32 %v1141, 0.0
    %v1379 = vmax.f32 %v1143, 0.0
    %v1380 = vmax.f32 %v1302, 0.0
    %v1381 = vmax.f32 %v1304, 0.0
    %v1382 = vmax.f32 %v1147, 0.0
    %v1383 = vmax.f32 %v1149, 0.0
    %v1384 = vmax.f32 %v1308, 0.0
    %v1385 = vmax.f32 %v1310, 0.0
    %v1386 = vmax.f32 %v1153, 0.0
    %v1387 = vmax.f32 %v1155, 0.0
    %v1388 = vmax.f32 %v1314, 0.0
    %v1389 = vmax.f32 %v1316, 0.0
    %v1390 = vmax.f32 %v1159, 0.0
    %v1391 = vmax.f32 %v1161, 0.0
    %v1392 = vmax.f32 %v1320, 0.0
    %v1393 = vmax.f32 %v1322, 0.0
    %v1394 = vmax.f32 %v1165, 0.0
    %v1395 = vmax.f32 %v1167, 0.0
    %v1396 = vmax.f32 %v1326, 0.0
    %v1397 = vmax.f32 %v1328, 0.0
    %v1398 = vmax.f32 %v1171, 0.0
    %v1399 = vmax.f32 %v1173, 0.0
    %v1400 = vmax.f32 %v1332, 0.0
    %v1401 = vmax.f32 %v1334, 0.0
    %v1402 = vmax.f32 %v1177, 0.0
    %v1403 = vmax.f32 %v1179, 0.0
    %v1404 = vmax.f32 %v1338, 0.0
    %v1405 = vmax.f32 %v1340, 0.0
    %v1406 = vld [vmem:[%s5] sm:$0x1]
    %s1407 = sld [smem:[#allocation2]]
    %v1408 = vstv %s1407
    %1409 = vmatprep.subr.mxu0 %v1403
    %1410 = vmatpush1.msra.mxu0 %v1402
    %1411 = vmatprep.subr.mxu0 %v1399
    %1412 = vmatpush1.msra.mxu0 %v1398
    %1413 = vmatprep.subr.mxu0 %v1395
    %1414 = vmatpush1.msra.mxu0 %v1394
    %1415 = vmatprep.subr.mxu0 %v1391
    %1416 = vmatpush1.msra.mxu0 %v1390
    %1417 = vmatprep.subr.mxu0 %v1387
    %1418 = vmatpush1.msra.mxu0 %v1386
    %1419 = vmatprep.subr.mxu0 %v1383
    %1420 = vmatpush1.msra.mxu0 %v1382
    %1421 = vmatprep.subr.mxu0 %v1379
    %1422 = vmatpush1.msra.mxu0 %v1378
    %1423 = vmatprep.subr.mxu0 %v1375
    %1424 = vmatpush1.msra.mxu0 %v1374
    %1425 = vmatprep.subr.mxu0 %v1371
    %1426 = vmatpush1.msra.mxu0 %v1370
    %1427 = vmatprep.subr.mxu0 %v1367
    %1428 = vmatpush1.msra.mxu0 %v1366
    %1429 = vmatprep.subr.mxu0 %v1363
    %1430 = vmatpush1.msra.mxu0 %v1362
    %1431 = vmatprep.subr.mxu0 %v1359
    %1432 = vmatpush1.msra.mxu0 %v1358
    %1433 = vmatprep.subr.mxu0 %v1355
    %1434 = vmatpush1.msra.mxu0 %v1354
    %1435 = vmatprep.subr.mxu0 %v1351
    %1436 = vmatpush1.msra.mxu0 %v1350
    %1437 = vmatprep.subr.mxu0 %v1347
    %1438 = vmatpush1.msra.mxu0 %v1346
    %1439 = vmatprep.subr.mxu0 %v1343
    %1440 = vmatpush1.msra.mxu0 %v1342
    %1441 = vmatprep.subr.mxu0 0.0
    %1442 = vmatpush2.msra.mxu0 0.0
    %1443 = vmatprep.subr.mxu0 0.0
    %1444 = vmatpush2.msra.mxu0 0.0
    %1445 = vmatprep.subr.mxu0 0.0
    %1446 = vmatpush2.msra.mxu0 0.0
    %1447 = vmatprep.subr.mxu0 0.0
    %1448 = vmatpush2.msra.mxu0 0.0
    %1449 = vmatprep.subr.mxu0 0.0
    %1450 = vmatpush2.msra.mxu0 0.0
    %1451 = vmatprep.subr.mxu0 0.0
    %1452 = vmatpush2.msra.mxu0 0.0
    %1453 = vmatprep.subr.mxu0 0.0
    %1454 = vmatpush2.msra.mxu0 0.0
    %1455 = vmatprep.subr.mxu0 0.0
    %1456 = vmatpush2.msra.mxu0 0.0
    %1457 = vmatprep.subr.mxu0 0.0
    %1458 = vmatpush2.msra.mxu0 0.0
    %1459 = vmatprep.subr.mxu0 0.0
    %1460 = vmatpush2.msra.mxu0 0.0
    %1461 = vmatprep.subr.mxu0 0.0
    %1462 = vmatpush2.msra.mxu0 0.0
    %1463 = vmatprep.subr.mxu0 0.0
    %1464 = vmatpush2.msra.mxu0 0.0
    %1465 = vmatprep.subr.mxu0 0.0
    %1466 = vmatpush2.msra.mxu0 0.0
    %1467 = vmatprep.subr.mxu0 0.0
    %1468 = vmatpush2.msra.mxu0 0.0
    %1469 = vmatprep.subr.mxu0 0.0
    %1470 = vmatpush2.msra.mxu0 0.0
    %1471 = vmatprep.subr.mxu0 0.0
    %1472 = vmatpush2.msra.mxu0 0.0
    %1473 = vmatprep.mubr.f32.mxu0 0.0
    %1474 = vmatmul.mubr.f32.gmra.mxu0 %v1406
    %v1475 = vpop.f32.mrf.mxu0
    %v1476 = vadd.f32 %v1408, %v1475
    %v1477 = vpop.f32.mrf.mxu0
    %v1478 = vadd.f32 %v1408, %v1477
    %1479 = vdwg.mxu0
    %1480 = vmatprep.subr.mxu0 %v1405
    %1481 = vmatpush1.msra.mxu0 %v1404
    %1482 = vmatprep.subr.mxu0 %v1401
    %1483 = vmatpush1.msra.mxu0 %v1400
    %1484 = vmatprep.subr.mxu0 %v1397
    %1485 = vmatpush1.msra.mxu0 %v1396
    %1486 = vmatprep.subr.mxu0 %v1393
    %1487 = vmatpush1.msra.mxu0 %v1392
    %1488 = vmatprep.subr.mxu0 %v1389
    %1489 = vmatpush1.msra.mxu0 %v1388
    %1490 = vmatprep.subr.mxu0 %v1385
    %1491 = vmatpush1.msra.mxu0 %v1384
    %1492 = vmatprep.subr.mxu0 %v1381
    %1493 = vmatpush1.msra.mxu0 %v1380
    %1494 = vmatprep.subr.mxu0 %v1377
    %1495 = vmatpush1.msra.mxu0 %v1376
    %1496 = vmatprep.subr.mxu0 %v1373
    %1497 = vmatpush1.msra.mxu0 %v1372
    %1498 = vmatprep.subr.mxu0 %v1369
    %1499 = vmatpush1.msra.mxu0 %v1368
    %1500 = vmatprep.subr.mxu0 %v1365
    %1501 = vmatpush1.msra.mxu0 %v1364
    %1502 = vmatprep.subr.mxu0 %v1361
    %1503 = vmatpush1.msra.mxu0 %v1360
    %1504 = vmatprep.subr.mxu0 %v1357
    %1505 = vmatpush1.msra.mxu0 %v1356
    %1506 = vmatprep.subr.mxu0 %v1353
    %1507 = vmatpush1.msra.mxu0 %v1352
    %1508 = vmatprep.subr.mxu0 %v1349
    %1509 = vmatpush1.msra.mxu0 %v1348
    %1510 = vmatprep.subr.mxu0 %v1345
    %1511 = vmatpush1.msra.mxu0 %v1344
    %1512 = vmatprep.subr.mxu0 0.0
    %1513 = vmatpush2.msra.mxu0 0.0
    %1514 = vmatprep.subr.mxu0 0.0
    %1515 = vmatpush2.msra.mxu0 0.0
    %1516 = vmatprep.subr.mxu0 0.0
    %1517 = vmatpush2.msra.mxu0 0.0
    %1518 = vmatprep.subr.mxu0 0.0
    %1519 = vmatpush2.msra.mxu0 0.0
    %1520 = vmatprep.subr.mxu0 0.0
    %1521 = vmatpush2.msra.mxu0 0.0
    %1522 = vmatprep.subr.mxu0 0.0
    %1523 = vmatpush2.msra.mxu0 0.0
    %1524 = vmatprep.subr.mxu0 0.0
    %1525 = vmatpush2.msra.mxu0 0.0
    %1526 = vmatprep.subr.mxu0 0.0
    %1527 = vmatpush2.msra.mxu0 0.0
    %1528 = vmatprep.subr.mxu0 0.0
    %1529 = vmatpush2.msra.mxu0 0.0
    %1530 = vmatprep.subr.mxu0 0.0
    %1531 = vmatpush2.msra.mxu0 0.0
    %1532 = vmatprep.subr.mxu0 0.0
    %1533 = vmatpush2.msra.mxu0 0.0
    %1534 = vmatprep.subr.mxu0 0.0
    %1535 = vmatpush2.msra.mxu0 0.0
    %1536 = vmatprep.subr.mxu0 0.0
    %1537 = vmatpush2.msra.mxu0 0.0
    %1538 = vmatprep.subr.mxu0 0.0
    %1539 = vmatpush2.msra.mxu0 0.0
    %1540 = vmatprep.subr.mxu0 0.0
    %1541 = vmatpush2.msra.mxu0 0.0
    %1542 = vmatprep.subr.mxu0 0.0
    %1543 = vmatpush2.msra.mxu0 0.0
    %1544 = vmatprep.mubr.f32.mxu0 0.0
    %1545 = vmatmul.mubr.f32.gmra.mxu0 %v1406
    %v1546 = vpop.f32.mrf.mxu0
    %v1547 = vadd.f32 %v1408, %v1546
    %v1548 = vpop.f32.mrf.mxu0
    %v1549 = vadd.f32 %v1408, %v1548
    %1550 = vdwg.mxu0
    %v1555 = vcombine.low %v1476, %v1478
    %v1556 = vcombine.low %v1547, %v1549
    %v1558 = vunpack.c.l.s4 1966171168
    %v1559 = vunpack.c.0.s8 %v1558
    %v1560 = vlaneseq
    %v1561 = vshrl.u32 %v1560, 7
    %v1562 = vsub.s32 %v1559, %v1561
    %v1563 = vrot.slane %v1555, %v1562
    %v1565 = vunpack.c.l.s4 1966171168
    %v1566 = vunpack.c.0.s8 %v1565
    %v1567 = vlaneseq
    %v1568 = vshrl.u32 %v1567, 7
    %v1569 = vsub.s32 %v1566, %v1568
    %v1570 = vrot.slane %v1556, %v1569
    %v1571 = vcombine.low %v1563, %v1570
    %v1573 = vunpack.c.l.s4 1966171168
    %v1574 = vunpack.c.0.s8 %v1573
    %v1575 = vlaneseq
    %v1576 = vshrl.u32 %v1575, 7
    %v1577 = vsub.s32 %v1574, %v1576
    %v1578 = vrot.slane %v1571, %v1577
    %v1580 = vlaneseq
    %vm1581 = vcmp.ge.s32.totalorder %v1580, 0
    %vm1582 = vcmp.lt.s32.totalorder %v1580, 512
    %vm1583 = vmand %vm1581, %vm1582
    %1584 = vst.msk [vmem:[#allocation3] sm:$0xf] %vm1583, %v1578
    // Predicated region
    $region30: #{heat_equation_nn.1} parent=1 // pred_check
      _
    $region31: #{heat_equation_nn.1} parent=1 // pred_check_branch
      %1586 = sbr.rel (0) target = $region33
    $region32: #{heat_equation_nn.1} parent=1 // pred_region
      %s1588 = ssub.s32 64, 32
      %1589 = vsyncadd [#allocation4], %s1588
      %s1591 = sshll.u32 [#allocation3], 4
      %s1592 = int_to_ptr.vmem [resolvable:$true] %s1591
      %1594 = dma.vmem_to_hbm [thread:$0]  %s1592, 32, %s7, [#allocation4]
    $region33: #{heat_equation_nn.1} parent=1 // pred_fallthru
      _
    // Predicated region
    $region34: #{heat_equation_nn.1} parent=1 // pred_check
      _
    $region35: #{heat_equation_nn.1} parent=1 // pred_check_branch
      %1596 = sbr.rel (0) target = $region37
    $region36: #{heat_equation_nn.1} parent=1 // pred_region
      %1597 = dma.done [#allocation4], 64
    $region37: #{heat_equation_nn.1} parent=1 // pred_fallthru
      _
    %1598 = vsyncpa [#allocation4], 1

</llo_original>
